<compile_context>
chip_gen: v7x
topology: tpu7x:2x2x1
jax: 0.10.0
libtpu: 0.0.40
codegen_flags: <defaults>
</compile_context>

<pallas_src>
import jax
import jax.numpy as jnp
import numpy as np
from jax.experimental import pallas as pl
from jax.experimental.pallas import tpu as pltpu


# ----------------------------- helpers --------------------------------------

def _lrelu(v):
    # LeakyReLU(negative_slope=0.2), kept in f32 (v5e has no bf16 VPU path).
    return jnp.where(v >= 0, v, 0.2 * v)


def _round_up(x, m):
    return ((x + m - 1) // m) * m


# ------------------------------ kernel --------------------------------------

def disc_kernel(x_ref, w1_ref, b1_ref, w2_ref, b2_ref, w3_ref, b3_ref,
                cw_ref, cb_ref, out_ref):
    # ---- connection: 3x (Linear + LeakyReLU(0.2)) on the MXU ----------------
    # x_ref: (BT, 512) bf16, weights bf16 (padded with zeros), biases f32.
    x = x_ref[...]
    h = _lrelu(jnp.dot(x, w1_ref[...],
                       preferred_element_type=jnp.float32) + b1_ref[...])
    h = _lrelu(jnp.dot(h.astype(jnp.bfloat16), w2_ref[...],
                       preferred_element_type=jnp.float32) + b2_ref[...])
    h = _lrelu(jnp.dot(h.astype(jnp.bfloat16), w3_ref[...],
                       preferred_element_type=jnp.float32) + b3_ref[...])
    # h: (BT, 128) f32; lanes 100..127 are zero (zero-padded weights/biases).

    # ---- model: Conv1d(1, 3, kernel_size=1, stride=1, padding=1) + LeakyReLU
    # With k=1 and zero-padding 1 on each side of the length axis:
    #   y[b, c, t] = cw[c] * hpad[b, t] + cb[c],  hpad length 102,
    #   border positions (t=0, t=101) see hpad == 0.
    bt = x.shape[0]
    zero_col = jnp.zeros((bt, 1), jnp.float32)
    hpad = jnp.concatenate([zero_col, h[:, :100], zero_col], axis=-1)  # (BT, 102)

    # Build the full lane-dense (BT, 306) slab in registers, store exactly once
    # (single unmasked store; no per-channel broadcasts / double writes).
    rows = []
    for c in range(3):                       # static unroll over 3 out-channels
        wc = cw_ref[c]                       # scalar weight from SMEM
        bc = cb_ref[c]                       # scalar bias from SMEM
        rows.append(_lrelu(hpad * wc + bc))
    out_ref[...] = jnp.concatenate(rows, axis=-1).astype(out_ref.dtype)

    # TODO(synk): self.Residual = restnet18cbam(100, cbam=True, linear=True) is
    # not defined in the provided Model.py, so the residual/CBAM head is omitted.


# ------------------------------ params --------------------------------------

def init_params(key):
    ks = jax.random.split(key, 8)
    scale = 0.05
    p = {
        # Linear weights stored pre-transposed: (in, out), so y = x @ W + b.
        "w1": scale * jax.random.normal(ks[0], (504, 100), jnp.float32),
        "b1": scale * jax.random.normal(ks[1], (1, 100), jnp.float32),
        "w2": scale * jax.random.normal(ks[2], (100, 100), jnp.float32),
        "b2": scale * jax.random.normal(ks[3], (1, 100), jnp.float32),
        "w3": scale * jax.random.normal(ks[4], (100, 100), jnp.float32),
        "b3": scale * jax.random.normal(ks[5], (1, 100), jnp.float32),
        # Conv1d(1, 3, k=1): weight (3,1,1) -> flattened to (3,), bias (3,)
        "cw": scale * jax.random.normal(ks[6], (3,), jnp.float32),
        "cb": scale * jax.random.normal(ks[7], (3,), jnp.float32),
    }
    return p


def prepare_params(p):
    """Zero-pad to MXU-friendly tiles and cast matmul operands to bf16."""
    return {
        "w1": jnp.pad(p["w1"], ((0, 512 - 504), (0, 128 - 100))).astype(jnp.bfloat16),
        "b1": jnp.pad(p["b1"], ((0, 0), (0, 128 - 100))),                 # f32
        "w2": jnp.pad(p["w2"], ((0, 128 - 100), (0, 128 - 100))).astype(jnp.bfloat16),
        "b2": jnp.pad(p["b2"], ((0, 0), (0, 128 - 100))),                 # f32
        "w3": jnp.pad(p["w3"], ((0, 128 - 100), (0, 128 - 100))).astype(jnp.bfloat16),
        "b3": jnp.pad(p["b3"], ((0, 0), (0, 128 - 100))),                 # f32
        "cw": p["cw"].astype(jnp.float32),
        "cb": p["cb"].astype(jnp.float32),
    }


# ------------------------------ wrapper -------------------------------------

def discriminator_forward(label, spec, padded_params, *, b_tile=256):
    B = label.shape[0]

    # Concatenate straight into the zero-padded (B_pad, 512) bf16 buffer the
    # kernel needs (single fused pad/concat; no extra f32 HBM round trip).
    x = jnp.concatenate([label, spec], axis=-1).astype(jnp.float32)      # (B, 504)

    bt = _round_up(min(b_tile, _round_up(B, 8)), 8)   # sublane-multiple tile
    B_pad = _round_up(B, bt)
    x_pad = jnp.pad(x, ((0, B_pad - B), (0, 512 - 504))).astype(jnp.bfloat16)

    p = padded_params
    grid = (B_pad // bt,)

    # Weights/biases: constant index_map -> stay VMEM-resident across the grid.
    w_spec = lambda shape: pl.BlockSpec(shape, lambda i: (0, 0))
    smem = pl.BlockSpec(memory_space=pltpu.MemorySpace.SMEM)

    out = pl.pallas_call(
        disc_kernel,
        out_shape=jax.ShapeDtypeStruct((B_pad, 3 * 102), jnp.float32),
        grid=grid,
        in_specs=[
            pl.BlockSpec((bt, 512), lambda i: (i, 0)),   # activations (pipelined)
            w_spec((512, 128)), w_spec((1, 128)),        # layer 1
            w_spec((128, 128)), w_spec((1, 128)),        # layer 2
            w_spec((128, 128)), w_spec((1, 128)),        # layer 3
            smem, smem,                                  # conv scalars
        ],
        out_specs=pl.BlockSpec((bt, 3 * 102), lambda i: (i, 0)),
        compiler_params=pltpu.CompilerParams(
            dimension_semantics=("parallel",),           # v7x: shard across TCs
        ),
    )(x_pad, p["w1"], p["b1"], p["w2"], p["b2"], p["w3"], p["b3"],
      p["cw"], p["cb"])

    # Drop batch padding; contiguous (free) reshape to the PyTorch NCL layout.
    return out[:B].reshape(B, 3, 102)


# ----------------------------- reference ------------------------------------

def reference_forward(label, spec, params):
    # Pure-JAX reference of the same math (mirrors the bf16 matmul inputs /
    # f32 accumulation used by the kernel so comparisons are tight).
    x = jnp.concatenate([label, spec], axis=-1).astype(jnp.float32)

    def layer(h, w, b):
        y = jnp.dot(h.astype(jnp.bfloat16), w.astype(jnp.bfloat16),
                    preferred_element_type=jnp.float32) + b
        return _lrelu(y)

    h = layer(x, params["w1"], params["b1"])
    h = layer(h, params["w2"], params["b2"])
    h = layer(h, params["w3"], params["b3"])                           # (B, 100)
    hpad = jnp.pad(h, ((0, 0), (1, 1)))                                # (B, 102)
    y = hpad[:, None, :] * params["cw"][None, :, None] + params["cb"][None, :, None]
    return _lrelu(y)                                                   # (B, 3, 102)


# ------------------------------- main ---------------------------------------

if __name__ == "__main__":
    key = jax.random.PRNGKey(0)
    k_param, k_label, k_spec = jax.random.split(key, 3)

    params = init_params(k_param)
    padded = prepare_params(params)

    # Small deterministic inputs; label(4) + spec(500) = 504 features,
    # matching nn.Linear(504, 100) in `connection`.
    B = 2
    label = jax.random.normal(k_label, (B, 4), jnp.float32)
    spec = jax.random.normal(k_spec, (B, 500), jnp.float32)

    out = discriminator_forward(label, spec, padded)
    out = jax.block_until_ready(out)

    ref = reference_forward(label, spec, params)
    np.testing.assert_allclose(np.asarray(out), np.asarray(ref),
                               rtol=2e-3, atol=2e-4)

    assert out.shape == (B, 3, 102)
    print("KERNEL_OK")
</pallas_src>

<mosaic_0001>
module attributes {stable_mosaic.version = 11 : i64} {
  func.func @disc_kernel(%arg0: i32, %arg1: memref<8x512xbf16, #tpu.memory_space<vmem>>, %arg2: memref<512x128xbf16, #tpu.memory_space<vmem>>, %arg3: memref<1x128xf32, #tpu.memory_space<vmem>>, %arg4: memref<128x128xbf16, #tpu.memory_space<vmem>>, %arg5: memref<1x128xf32, #tpu.memory_space<vmem>>, %arg6: memref<128x128xbf16, #tpu.memory_space<vmem>>, %arg7: memref<1x128xf32, #tpu.memory_space<vmem>>, %arg8: memref<3xf32, #tpu.memory_space<smem>>, %arg9: memref<3xf32, #tpu.memory_space<smem>>, %arg10: memref<8x306xf32, #tpu.memory_space<vmem>>) attributes {dimension_semantics = [#tpu.dimension_semantics<parallel>], iteration_bounds = array<i64: 1>, scalar_prefetch = 0 : i64, scratch_operands = 0 : i64, tpu.core_type = #tpu.core_type<tc>, window_params = [{transform_indices = @transform_0, window_bounds = array<i64: 8, 512>}, {pipeline_mode = #tpu.pipeline_mode<synchronous>, transform_indices = @transform_1, window_bounds = array<i64: 512, 128>}, {pipeline_mode = #tpu.pipeline_mode<synchronous>, transform_indices = @transform_2, window_bounds = array<i64: 1, 128>}, {pipeline_mode = #tpu.pipeline_mode<synchronous>, transform_indices = @transform_3, window_bounds = array<i64: 128, 128>}, {pipeline_mode = #tpu.pipeline_mode<synchronous>, transform_indices = @transform_4, window_bounds = array<i64: 1, 128>}, {pipeline_mode = #tpu.pipeline_mode<synchronous>, transform_indices = @transform_5, window_bounds = array<i64: 128, 128>}, {pipeline_mode = #tpu.pipeline_mode<synchronous>, transform_indices = @transform_6, window_bounds = array<i64: 1, 128>}, {transform_indices = @transform_7, window_bounds = array<i64: 3>}, {transform_indices = @transform_8, window_bounds = array<i64: 3>}, {transform_indices = @transform_9, window_bounds = array<i64: 8, 306>}]} {
    %c0 = arith.constant 0 : index
    %c0_0 = arith.constant 0 : index
    %0 = vector.load %arg1[%c0, %c0_0] : memref<8x512xbf16, #tpu.memory_space<vmem>>, vector<8x512xbf16>
    %c0_1 = arith.constant 0 : index
    %c0_2 = arith.constant 0 : index
    %1 = vector.load %arg2[%c0_1, %c0_2] : memref<512x128xbf16, #tpu.memory_space<vmem>>, vector<512x128xbf16>
    %cst = arith.constant dense<0.000000e+00> : vector<8x128xf32>
    %2 = tpu.matmul %0, %1, %cst {dimension_numbers = #tpu.dot_dimension_numbers<[1], [0], [0], [1], [0, 0, 1, 1], [], []>} : vector<8x512xbf16>, vector<512x128xbf16>, vector<8x128xf32> -> vector<8x128xf32>
    %c0_3 = arith.constant 0 : index
    %c0_4 = arith.constant 0 : index
    %3 = vector.load %arg3[%c0_3, %c0_4] : memref<1x128xf32, #tpu.memory_space<vmem>>, vector<1x128xf32>
    %4 = vector.broadcast %3 : vector<1x128xf32> to vector<8x128xf32>
    %5 = arith.addf %2, %4 : vector<8x128xf32>
    %cst_5 = arith.constant 0.000000e+00 : f32
    %6 = vector.broadcast %cst_5 : f32 to vector<8x128xf32>
    %7 = arith.cmpf oge, %5, %6 : vector<8x128xf32>
    %cst_6 = arith.constant 2.000000e-01 : f32
    %8 = vector.broadcast %cst_6 : f32 to vector<8x128xf32>
    %9 = arith.mulf %8, %5 : vector<8x128xf32>
    %10 = arith.select %7, %5, %9 : vector<8x128xi1>, vector<8x128xf32>
    %11 = arith.truncf %10 : vector<8x128xf32> to vector<8x128xbf16>
    %c0_7 = arith.constant 0 : index
    %c0_8 = arith.constant 0 : index
    %12 = vector.load %arg4[%c0_7, %c0_8] : memref<128x128xbf16, #tpu.memory_space<vmem>>, vector<128x128xbf16>
    %cst_9 = arith.constant dense<0.000000e+00> : vector<8x128xf32>
    %13 = tpu.matmul %11, %12, %cst_9 {dimension_numbers = #tpu.dot_dimension_numbers<[1], [0], [0], [1], [0, 0, 1, 1], [], []>} : vector<8x128xbf16>, vector<128x128xbf16>, vector<8x128xf32> -> vector<8x128xf32>
    %c0_10 = arith.constant 0 : index
    %c0_11 = arith.constant 0 : index
    %14 = vector.load %arg5[%c0_10, %c0_11] : memref<1x128xf32, #tpu.memory_space<vmem>>, vector<1x128xf32>
    %15 = vector.broadcast %14 : vector<1x128xf32> to vector<8x128xf32>
    %16 = arith.addf %13, %15 : vector<8x128xf32>
    %cst_12 = arith.constant 0.000000e+00 : f32
    %17 = vector.broadcast %cst_12 : f32 to vector<8x128xf32>
    %18 = arith.cmpf oge, %16, %17 : vector<8x128xf32>
    %cst_13 = arith.constant 2.000000e-01 : f32
    %19 = vector.broadcast %cst_13 : f32 to vector<8x128xf32>
    %20 = arith.mulf %19, %16 : vector<8x128xf32>
    %21 = arith.select %18, %16, %20 : vector<8x128xi1>, vector<8x128xf32>
    %22 = arith.truncf %21 : vector<8x128xf32> to vector<8x128xbf16>
    %c0_14 = arith.constant 0 : index
    %c0_15 = arith.constant 0 : index
    %23 = vector.load %arg6[%c0_14, %c0_15] : memref<128x128xbf16, #tpu.memory_space<vmem>>, vector<128x128xbf16>
    %cst_16 = arith.constant dense<0.000000e+00> : vector<8x128xf32>
    %24 = tpu.matmul %22, %23, %cst_16 {dimension_numbers = #tpu.dot_dimension_numbers<[1], [0], [0], [1], [0, 0, 1, 1], [], []>} : vector<8x128xbf16>, vector<128x128xbf16>, vector<8x128xf32> -> vector<8x128xf32>
    %c0_17 = arith.constant 0 : index
    %c0_18 = arith.constant 0 : index
    %25 = vector.load %arg7[%c0_17, %c0_18] : memref<1x128xf32, #tpu.memory_space<vmem>>, vector<1x128xf32>
    %26 = vector.broadcast %25 : vector<1x128xf32> to vector<8x128xf32>
    %27 = arith.addf %24, %26 : vector<8x128xf32>
    %cst_19 = arith.constant 0.000000e+00 : f32
    %28 = vector.broadcast %cst_19 : f32 to vector<8x128xf32>
    %29 = arith.cmpf oge, %27, %28 : vector<8x128xf32>
    %cst_20 = arith.constant 2.000000e-01 : f32
    %30 = vector.broadcast %cst_20 : f32 to vector<8x128xf32>
    %31 = arith.mulf %30, %27 : vector<8x128xf32>
    %32 = arith.select %29, %27, %31 : vector<8x128xi1>, vector<8x128xf32>
    %cst_21 = arith.constant 0.000000e+00 : f32
    %33 = vector.broadcast %cst_21 : f32 to vector<8x1xf32>
    %34 = vector.extract_strided_slice %32 {offsets = [0, 0], sizes = [8, 100], strides = [1, 1]} : vector<8x128xf32> to vector<8x100xf32>
    %35 = tpu.concatenate %33, %34, %33 in 1 : vector<8x1xf32>, vector<8x100xf32>, vector<8x1xf32> -> vector<8x102xf32>
    %c0_22 = arith.constant 0 : index
    %36 = memref.load %arg8[%c0_22] : memref<3xf32, #tpu.memory_space<smem>>
    %c0_23 = arith.constant 0 : index
    %37 = memref.load %arg9[%c0_23] : memref<3xf32, #tpu.memory_space<smem>>
    %38 = vector.broadcast %36 : f32 to vector<8x102xf32>
    %39 = arith.mulf %35, %38 : vector<8x102xf32>
    %40 = vector.broadcast %37 : f32 to vector<8x102xf32>
    %41 = arith.addf %39, %40 : vector<8x102xf32>
    %cst_24 = arith.constant 0.000000e+00 : f32
    %42 = vector.broadcast %cst_24 : f32 to vector<8x102xf32>
    %43 = arith.cmpf oge, %41, %42 : vector<8x102xf32>
    %cst_25 = arith.constant 2.000000e-01 : f32
    %44 = vector.broadcast %cst_25 : f32 to vector<8x102xf32>
    %45 = arith.mulf %44, %41 : vector<8x102xf32>
    %46 = arith.select %43, %41, %45 : vector<8x102xi1>, vector<8x102xf32>
    %c1 = arith.constant 1 : index
    %47 = memref.load %arg8[%c1] : memref<3xf32, #tpu.memory_space<smem>>
    %c1_26 = arith.constant 1 : index
    %48 = memref.load %arg9[%c1_26] : memref<3xf32, #tpu.memory_space<smem>>
    %49 = vector.broadcast %47 : f32 to vector<8x102xf32>
    %50 = arith.mulf %35, %49 : vector<8x102xf32>
    %51 = vector.broadcast %48 : f32 to vector<8x102xf32>
    %52 = arith.addf %50, %51 : vector<8x102xf32>
    %cst_27 = arith.constant 0.000000e+00 : f32
    %53 = vector.broadcast %cst_27 : f32 to vector<8x102xf32>
    %54 = arith.cmpf oge, %52, %53 : vector<8x102xf32>
    %cst_28 = arith.constant 2.000000e-01 : f32
    %55 = vector.broadcast %cst_28 : f32 to vector<8x102xf32>
    %56 = arith.mulf %55, %52 : vector<8x102xf32>
    %57 = arith.select %54, %52, %56 : vector<8x102xi1>, vector<8x102xf32>
    %c2 = arith.constant 2 : index
    %58 = memref.load %arg8[%c2] : memref<3xf32, #tpu.memory_space<smem>>
    %c2_29 = arith.constant 2 : index
    %59 = memref.load %arg9[%c2_29] : memref<3xf32, #tpu.memory_space<smem>>
    %60 = vector.broadcast %58 : f32 to vector<8x102xf32>
    %61 = arith.mulf %35, %60 : vector<8x102xf32>
    %62 = vector.broadcast %59 : f32 to vector<8x102xf32>
    %63 = arith.addf %61, %62 : vector<8x102xf32>
    %cst_30 = arith.constant 0.000000e+00 : f32
    %64 = vector.broadcast %cst_30 : f32 to vector<8x102xf32>
    %65 = arith.cmpf oge, %63, %64 : vector<8x102xf32>
    %cst_31 = arith.constant 2.000000e-01 : f32
    %66 = vector.broadcast %cst_31 : f32 to vector<8x102xf32>
    %67 = arith.mulf %66, %63 : vector<8x102xf32>
    %68 = arith.select %65, %63, %67 : vector<8x102xi1>, vector<8x102xf32>
    %69 = tpu.concatenate %46, %57, %68 in 1 : vector<8x102xf32>, vector<8x102xf32>, vector<8x102xf32> -> vector<8x306xf32>
    %c0_32 = arith.constant 0 : index
    %c0_33 = arith.constant 0 : index
    %70 = vector.load %arg10[%c0_32, %c0_33] : memref<8x306xf32, #tpu.memory_space<vmem>>, vector<8x306xf32>
    tpu.vector_store %arg10[%c0_32, %c0_33], %69 {strides = array<i32>} : memref<8x306xf32, #tpu.memory_space<vmem>>, vector<8x306xf32>,
    return
  }
  func.func @transform_0(%arg0: i32) -> (i32, i32) {
    %c0_i32 = arith.constant 0 : i32
    %c0_i32_0 = arith.constant 0 : i32
    return %arg0, %c0_i32 : i32, i32
  }
  func.func @transform_1(%arg0: i32) -> (i32, i32) {
    %c0_i32 = arith.constant 0 : i32
    %c0_i32_0 = arith.constant 0 : i32
    %c0_i32_1 = arith.constant 0 : i32
    return %c0_i32, %c0_i32_0 : i32, i32
  }
  func.func @transform_2(%arg0: i32) -> (i32, i32) {
    %c0_i32 = arith.constant 0 : i32
    %c0_i32_0 = arith.constant 0 : i32
    %c0_i32_1 = arith.constant 0 : i32
    return %c0_i32, %c0_i32_0 : i32, i32
  }
  func.func @transform_3(%arg0: i32) -> (i32, i32) {
    %c0_i32 = arith.constant 0 : i32
    %c0_i32_0 = arith.constant 0 : i32
    %c0_i32_1 = arith.constant 0 : i32
    return %c0_i32, %c0_i32_0 : i32, i32
  }
  func.func @transform_4(%arg0: i32) -> (i32, i32) {
    %c0_i32 = arith.constant 0 : i32
    %c0_i32_0 = arith.constant 0 : i32
    %c0_i32_1 = arith.constant 0 : i32
    return %c0_i32, %c0_i32_0 : i32, i32
  }
  func.func @transform_5(%arg0: i32) -> (i32, i32) {
    %c0_i32 = arith.constant 0 : i32
    %c0_i32_0 = arith.constant 0 : i32
    %c0_i32_1 = arith.constant 0 : i32
    return %c0_i32, %c0_i32_0 : i32, i32
  }
  func.func @transform_6(%arg0: i32) -> (i32, i32) {
    %c0_i32 = arith.constant 0 : i32
    %c0_i32_0 = arith.constant 0 : i32
    %c0_i32_1 = arith.constant 0 : i32
    return %c0_i32, %c0_i32_0 : i32, i32
  }
  func.func @transform_7(%arg0: i32) -> i32 {
    %c0_i32 = arith.constant 0 : i32
    %c0_i32_0 = arith.constant 0 : i32
    return %c0_i32 : i32
  }
  func.func @transform_8(%arg0: i32) -> i32 {
    %c0_i32 = arith.constant 0 : i32
    %c0_i32_0 = arith.constant 0 : i32
    return %c0_i32 : i32
  }
  func.func @transform_9(%arg0: i32) -> (i32, i32) {
    %c0_i32 = arith.constant 0 : i32
    %c0_i32_0 = arith.constant 0 : i32
    return %arg0, %c0_i32 : i32, i32
  }
}

</mosaic_0001>

<llo_original>
// kernel: tpu_custom_call.1
$region0: #{tpu_custom_call.1}
  #allocation0 [shape = 'u32[]', space=smem, size = 0x4, offset = 0x4, fixed_abs, tag = 'smem constant byte address 0x4 - core index']
  #allocation1 [shape = 'u32[144,128]{1,0:T(1,128)}', space=vmem, size = 0x12000, scoped, tag = 'internal scratch']
  %s0 = inlined_call_operand.hbm [shape: bf16[8,512], index: 0, kind: input, shape index: {}]
  %s1 = inlined_call_operand.hbm [shape: bf16[512,128], index: 1, kind: input, shape index: {}]
  %s2 = inlined_call_operand.vmem [shape: f32[1,128], index: 2, kind: input, shape index: {}]
  %s3 = inlined_call_operand.hbm [shape: bf16[128,128], index: 3, kind: input, shape index: {}]
  %s4 = inlined_call_operand.vmem [shape: f32[1,128], index: 4, kind: input, shape index: {}]
  %s5 = inlined_call_operand.hbm [shape: bf16[128,128], index: 5, kind: input, shape index: {}]
  %s6 = inlined_call_operand.vmem [shape: f32[1,128], index: 6, kind: input, shape index: {}]
  %s7 = inlined_call_operand.vmem [shape: f32[3], index: 7, kind: input, shape index: {}]
  %s8 = inlined_call_operand.vmem [shape: f32[3], index: 8, kind: input, shape index: {}]
  %s9 = inlined_call_operand.hbm [shape: f32[8,306], index: 9, kind: output, shape index: {}]
  %s10 = sld [smem:[#allocation0]]
  $region70: #{tpu_custom_call.1} parent=0
    _
  %s12 = ssub.s32 1, %s10
  %s13 = scalar_select 0, %s12, %s10
  $region1: #{tpu_custom_call.1} parent=0
    #allocation2 [shape = 'u8[8192]{0}', space=vmem, size = 0x2000, scoped, tag = 'input window, operand 0, single buffered']
    #allocation3 [shape = 's32[1]{0}', space=sflag, size = 0x4, scoped, tag = 'scoped memory for tpu_custom_call.1']
    #allocation4 [shape = 's32[1]{0}', space=sflag, size = 0x4, scoped, tag = 'scoped memory for tpu_custom_call.1']
    #allocation5 [shape = 's32[1]{0}', space=sflag, size = 0x4, scoped, tag = 'scoped memory for tpu_custom_call.1']
    #allocation6 [shape = 'u8[131072]{0}', space=vmem, size = 0x20000, scoped, tag = 'input window, operand 1, single buffered']
    #allocation7 [shape = 's32[1]{0}', space=sflag, size = 0x4, scoped, tag = 'scoped memory for tpu_custom_call.1']
    #allocation8 [shape = 'u8[32768]{0}', space=vmem, size = 0x8000, scoped, tag = 'input window, operand 3, single buffered']
    #allocation9 [shape = 'u8[32768]{0}', space=vmem, size = 0x8000, scoped, tag = 'input window, operand 5, single buffered']
    #allocation10 [shape = 's32[1]{0}', space=sflag, size = 0x4, scoped, tag = 'scoped memory for tpu_custom_call.1']
    #allocation11 [shape = 'u8[512]{0}', space=smem, size = 0x200, scoped, tag = 'input window, operand 7, single buffered']
    #allocation12 [shape = 'u8[512]{0}', space=smem, size = 0x200, scoped, tag = 'input window, operand 8, single buffered']
    #allocation13 [shape = 's32[1]{0}', space=sflag, size = 0x4, scoped, tag = 'scoped memory for tpu_custom_call.1']
    #allocation14 [shape = 'u8[12288]{0}', space=vmem, size = 0x3000, scoped, tag = 'output window, operand 0, single buffered']
    %14 = vsyncpa [#allocation3], 0
    %15 = vsyncpa [#allocation7], 0
    %16 = vsyncpa [#allocation10], 0
    %17 = vsyncpa [#allocation5], 0
    %18 = vsyncpa [#allocation13], 0
    %19 = vsyncpa [#allocation4], 0
    // Predicated region
    $region2: #{tpu_custom_call.1} parent=1 // pred_check
      _
    $region3: #{tpu_custom_call.1} parent=1 // pred_check_branch
      %21 = sbr.rel (0) target = $region5
    $region4: #{tpu_custom_call.1} parent=1 // pred_region
      %s23 = ssub.s32 256, 256
      %24 = vsyncadd [#allocation3], %s23
      %s26 = sshll.u32 [#allocation2], 4
      %s27 = int_to_ptr.vmem [resolvable:$true] %s26
      %29 = dma.hbm_to_vmem [thread:$0]  %s0, 256, %s27, [#allocation3]
    $region5: #{tpu_custom_call.1} parent=1 // pred_fallthru
      _
    // Predicated region
    $region6: #{tpu_custom_call.1} parent=1 // pred_check
      _
    $region7: #{tpu_custom_call.1} parent=1 // pred_check_branch
      %31 = sbr.rel (0) target = $region9
    $region8: #{tpu_custom_call.1} parent=1 // pred_region
      %s33 = ssub.s32 4096, 4096
      %34 = vsyncadd [#allocation7], %s33
      %s35 = sshll.u32 [#allocation6], 4
      %s36 = int_to_ptr.vmem [resolvable:$true] %s35
      %41 = dma.hbm_to_vmem [thread:$0]  %s1, 4096, %s36, [#allocation7], 64, 64, 4
    $region9: #{tpu_custom_call.1} parent=1 // pred_fallthru
      _
    // Predicated region
    $region10: #{tpu_custom_call.1} parent=1 // pred_check
      _
    $region11: #{tpu_custom_call.1} parent=1 // pred_check_branch
      %43 = sbr.rel (0) target = $region13
    $region12: #{tpu_custom_call.1} parent=1 // pred_region
      _
    $region13: #{tpu_custom_call.1} parent=1 // pred_fallthru
      _
    // Predicated region
    $region14: #{tpu_custom_call.1} parent=1 // pred_check
      _
    $region15: #{tpu_custom_call.1} parent=1 // pred_check_branch
      %45 = sbr.rel (0) target = $region17
    $region16: #{tpu_custom_call.1} parent=1 // pred_region
      %s47 = ssub.s32 1024, 1024
      %48 = vsyncadd [#allocation7], %s47
      %s49 = sshll.u32 [#allocation8], 4
      %s50 = int_to_ptr.vmem [resolvable:$true] %s49
      %55 = dma.hbm_to_vmem [thread:$0]  %s3, 1024, %s50, [#allocation7], 64, 64, 4
    $region17: #{tpu_custom_call.1} parent=1 // pred_fallthru
      _
    // Predicated region
    $region18: #{tpu_custom_call.1} parent=1 // pred_check
      _
    $region19: #{tpu_custom_call.1} parent=1 // pred_check_branch
      %57 = sbr.rel (0) target = $region21
    $region20: #{tpu_custom_call.1} parent=1 // pred_region
      _
    $region21: #{tpu_custom_call.1} parent=1 // pred_fallthru
      _
    // Predicated region
    $region22: #{tpu_custom_call.1} parent=1 // pred_check
      _
    $region23: #{tpu_custom_call.1} parent=1 // pred_check_branch
      %59 = sbr.rel (0) target = $region25
    $region24: #{tpu_custom_call.1} parent=1 // pred_region
      %s61 = ssub.s32 1024, 1024
      %62 = vsyncadd [#allocation10], %s61
      %s63 = sshll.u32 [#allocation9], 4
      %s64 = int_to_ptr.vmem [resolvable:$true] %s63
      %69 = dma.hbm_to_vmem [thread:$0]  %s5, 1024, %s64, [#allocation10], 64, 64, 4
    $region25: #{tpu_custom_call.1} parent=1 // pred_fallthru
      _
    // Predicated region
    $region26: #{tpu_custom_call.1} parent=1 // pred_check
      _
    $region27: #{tpu_custom_call.1} parent=1 // pred_check_branch
      %71 = sbr.rel (0) target = $region29
    $region28: #{tpu_custom_call.1} parent=1 // pred_region
      _
    $region29: #{tpu_custom_call.1} parent=1 // pred_fallthru
      _
    // Predicated region
    $region30: #{tpu_custom_call.1} parent=1 // pred_check
      _
    $region31: #{tpu_custom_call.1} parent=1 // pred_check_branch
      %73 = sbr.rel (0) target = $region33
    $region32: #{tpu_custom_call.1} parent=1 // pred_region
      %s75 = ssub.s32 16, 16
      %76 = vsyncadd [#allocation5], %s75
      %s78 = sshll.u32 %s7, 4
      %s79 = int_to_ptr.vmem [resolvable:$true] %s78
      %81 = dma.vmem_to_smem %s79, 16, [#allocation11], [#allocation5]
    $region33: #{tpu_custom_call.1} parent=1 // pred_fallthru
      _
    // Predicated region
    $region34: #{tpu_custom_call.1} parent=1 // pred_check
      _
    $region35: #{tpu_custom_call.1} parent=1 // pred_check_branch
      %83 = sbr.rel (0) target = $region37
    $region36: #{tpu_custom_call.1} parent=1 // pred_region
      %s85 = ssub.s32 16, 16
      %86 = vsyncadd [#allocation13], %s85
      %s88 = sshll.u32 %s8, 4
      %s89 = int_to_ptr.vmem [resolvable:$true] %s88
      %91 = dma.vmem_to_smem %s89, 16, [#allocation12], [#allocation13]
    $region37: #{tpu_custom_call.1} parent=1 // pred_fallthru
      _
    // Predicated region
    $region38: #{tpu_custom_call.1} parent=1 // pred_check
      _
    $region39: #{tpu_custom_call.1} parent=1 // pred_check_branch
      %93 = sbr.rel (0) target = $region41
    $region40: #{tpu_custom_call.1} parent=1 // pred_region
      %94 = dma.done [#allocation3], 256
    $region41: #{tpu_custom_call.1} parent=1 // pred_fallthru
      _
    // Predicated region
    $region42: #{tpu_custom_call.1} parent=1 // pred_check
      _
    $region43: #{tpu_custom_call.1} parent=1 // pred_check_branch
      %96 = sbr.rel (0) target = $region45
    $region44: #{tpu_custom_call.1} parent=1 // pred_region
      %97 = dma.done [#allocation7], 4096
    $region45: #{tpu_custom_call.1} parent=1 // pred_fallthru
      _
    // Predicated region
    $region46: #{tpu_custom_call.1} parent=1 // pred_check
      _
    $region47: #{tpu_custom_call.1} parent=1 // pred_check_branch
      %99 = sbr.rel (0) target = $region49
    $region48: #{tpu_custom_call.1} parent=1 // pred_region
      %100 = dma.done [#allocation7], 1024
    $region49: #{tpu_custom_call.1} parent=1 // pred_fallthru
      _
    // Predicated region
    $region50: #{tpu_custom_call.1} parent=1 // pred_check
      _
    $region51: #{tpu_custom_call.1} parent=1 // pred_check_branch
      %102 = sbr.rel (0) target = $region53
    $region52: #{tpu_custom_call.1} parent=1 // pred_region
      %103 = dma.done [#allocation10], 1024
    $region53: #{tpu_custom_call.1} parent=1 // pred_fallthru
      _
    // Predicated region
    $region54: #{tpu_custom_call.1} parent=1 // pred_check
      _
    $region55: #{tpu_custom_call.1} parent=1 // pred_check_branch
      %105 = sbr.rel (0) target = $region57
    $region56: #{tpu_custom_call.1} parent=1 // pred_region
      %106 = dma.done [#allocation5], 16
    $region57: #{tpu_custom_call.1} parent=1 // pred_fallthru
      _
    // Predicated region
    $region58: #{tpu_custom_call.1} parent=1 // pred_check
      _
    $region59: #{tpu_custom_call.1} parent=1 // pred_check_branch
      %108 = sbr.rel (0) target = $region61
    $region60: #{tpu_custom_call.1} parent=1 // pred_region
      %109 = dma.done [#allocation13], 16
    $region61: #{tpu_custom_call.1} parent=1 // pred_fallthru
      _
    %110 = sfence
    %v112 = vld [vmem:[#allocation2] sm:$0xff]
    %v113 = vld [vmem:[#allocation2 + $0x8] sm:$0xff]
    %v114 = vld [vmem:[#allocation6] sm:$0xf]
    %v115 = vld [vmem:[#allocation6 + $0x4] sm:$0xf]
    %v116 = vld [vmem:[#allocation6 + $0x8] sm:$0xf]
    %v117 = vld [vmem:[#allocation6 + $0xc] sm:$0xf]
    %v118 = vld [vmem:[#allocation6 + $0x10] sm:$0xf]
    %v119 = vld [vmem:[#allocation6 + $0x14] sm:$0xf]
    %v120 = vld [vmem:[#allocation6 + $0x18] sm:$0xf]
    %v121 = vld [vmem:[#allocation6 + $0x1c] sm:$0xf]
    %v122 = vld [vmem:[#allocation6 + $0x20] sm:$0xf]
    %v123 = vld [vmem:[#allocation6 + $0x24] sm:$0xf]
    %v124 = vld [vmem:[#allocation6 + $0x28] sm:$0xf]
    %v125 = vld [vmem:[#allocation6 + $0x2c] sm:$0xf]
    %v126 = vld [vmem:[#allocation6 + $0x30] sm:$0xf]
    %v127 = vld [vmem:[#allocation6 + $0x34] sm:$0xf]
    %v128 = vld [vmem:[#allocation6 + $0x38] sm:$0xf]
    %v129 = vld [vmem:[#allocation6 + $0x3c] sm:$0xf]
    %v130 = vld [vmem:[#allocation6 + $0x40] sm:$0xf]
    %v131 = vld [vmem:[#allocation6 + $0x44] sm:$0xf]
    %v132 = vld [vmem:[#allocation6 + $0x48] sm:$0xf]
    %v133 = vld [vmem:[#allocation6 + $0x4c] sm:$0xf]
    %v134 = vld [vmem:[#allocation6 + $0x50] sm:$0xf]
    %v135 = vld [vmem:[#allocation6 + $0x54] sm:$0xf]
    %v136 = vld [vmem:[#allocation6 + $0x58] sm:$0xf]
    %v137 = vld [vmem:[#allocation6 + $0x5c] sm:$0xf]
    %v138 = vld [vmem:[#allocation6 + $0x60] sm:$0xf]
    %v139 = vld [vmem:[#allocation6 + $0x64] sm:$0xf]
    %v140 = vld [vmem:[#allocation6 + $0x68] sm:$0xf]
    %v141 = vld [vmem:[#allocation6 + $0x6c] sm:$0xf]
    %v142 = vld [vmem:[#allocation6 + $0x70] sm:$0xf]
    %v143 = vld [vmem:[#allocation6 + $0x74] sm:$0xf]
    %v144 = vld [vmem:[#allocation6 + $0x78] sm:$0xf]
    %v145 = vld [vmem:[#allocation6 + $0x7c] sm:$0xf]
    %v146 = vld [vmem:[#allocation6 + $0x80] sm:$0xf]
    %v147 = vld [vmem:[#allocation6 + $0x84] sm:$0xf]
    %v148 = vld [vmem:[#allocation6 + $0x88] sm:$0xf]
    %v149 = vld [vmem:[#allocation6 + $0x8c] sm:$0xf]
    %v150 = vld [vmem:[#allocation6 + $0x90] sm:$0xf]
    %v151 = vld [vmem:[#allocation6 + $0x94] sm:$0xf]
    %v152 = vld [vmem:[#allocation6 + $0x98] sm:$0xf]
    %v153 = vld [vmem:[#allocation6 + $0x9c] sm:$0xf]
    %v154 = vld [vmem:[#allocation6 + $0xa0] sm:$0xf]
    %v155 = vld [vmem:[#allocation6 + $0xa4] sm:$0xf]
    %v156 = vld [vmem:[#allocation6 + $0xa8] sm:$0xf]
    %v157 = vld [vmem:[#allocation6 + $0xac] sm:$0xf]
    %v158 = vld [vmem:[#allocation6 + $0xb0] sm:$0xf]
    %v159 = vld [vmem:[#allocation6 + $0xb4] sm:$0xf]
    %v160 = vld [vmem:[#allocation6 + $0xb8] sm:$0xf]
    %v161 = vld [vmem:[#allocation6 + $0xbc] sm:$0xf]
    %v162 = vld [vmem:[#allocation6 + $0xc0] sm:$0xf]
    %v163 = vld [vmem:[#allocation6 + $0xc4] sm:$0xf]
    %v164 = vld [vmem:[#allocation6 + $0xc8] sm:$0xf]
    %v165 = vld [vmem:[#allocation6 + $0xcc] sm:$0xf]
    %v166 = vld [vmem:[#allocation6 + $0xd0] sm:$0xf]
    %v167 = vld [vmem:[#allocation6 + $0xd4] sm:$0xf]
    %v168 = vld [vmem:[#allocation6 + $0xd8] sm:$0xf]
    %v169 = vld [vmem:[#allocation6 + $0xdc] sm:$0xf]
    %v170 = vld [vmem:[#allocation6 + $0xe0] sm:$0xf]
    %v171 = vld [vmem:[#allocation6 + $0xe4] sm:$0xf]
    %v172 = vld [vmem:[#allocation6 + $0xe8] sm:$0xf]
    %v173 = vld [vmem:[#allocation6 + $0xec] sm:$0xf]
    %v174 = vld [vmem:[#allocation6 + $0xf0] sm:$0xf]
    %v175 = vld [vmem:[#allocation6 + $0xf4] sm:$0xf]
    %v176 = vld [vmem:[#allocation6 + $0xf8] sm:$0xf]
    %v177 = vld [vmem:[#allocation6 + $0xfc] sm:$0xf]
    %v178 = vld [vmem:[%s2] sm:$0x1]
    %v180 = vlaneseq
    %v181 = vshrl.u32 %v180, 7
    %v182 = vsub.s32 0, %v181
    %v183 = vrot.slane %v178, %v182
    %v187 = vunpack.c.l.b16 %v112
    %v188 = vunpack.c.h.b16 %v112
    %v189 = vunpack.c.l.b16 %v113
    %v190 = vunpack.c.h.b16 %v113
    %v191 = vpack.c.b16 %v187, %v187
    %v192 = vpack.c.b16 %v188, %v188
    %v193 = vpack.c.b16 %v189, %v189
    %v194 = vpack.c.b16 %v190, %v190
    %v263 = vunpack.c.l.b16 %v114
    %v264 = vunpack.c.l.b16 %v115
    %v265 = vunpack.c.l.b16 %v116
    %v266 = vunpack.c.l.b16 %v117
    %v267 = vunpack.c.l.b16 %v118
    %v268 = vunpack.c.l.b16 %v119
    %v269 = vunpack.c.l.b16 %v120
    %v270 = vunpack.c.l.b16 %v121
    %v271 = vunpack.c.l.b16 %v122
    %v272 = vunpack.c.l.b16 %v123
    %v273 = vunpack.c.l.b16 %v124
    %v274 = vunpack.c.l.b16 %v125
    %v275 = vunpack.c.l.b16 %v126
    %v276 = vunpack.c.l.b16 %v127
    %v277 = vunpack.c.l.b16 %v128
    %v278 = vunpack.c.l.b16 %v129
    %v279 = vunpack.c.l.b16 %v130
    %v280 = vunpack.c.l.b16 %v131
    %v281 = vunpack.c.l.b16 %v132
    %v282 = vunpack.c.l.b16 %v133
    %v283 = vunpack.c.l.b16 %v134
    %v284 = vunpack.c.l.b16 %v135
    %v285 = vunpack.c.l.b16 %v136
    %v286 = vunpack.c.l.b16 %v137
    %v287 = vunpack.c.l.b16 %v138
    %v288 = vunpack.c.l.b16 %v139
    %v289 = vunpack.c.l.b16 %v140
    %v290 = vunpack.c.l.b16 %v141
    %v291 = vunpack.c.l.b16 %v142
    %v292 = vunpack.c.l.b16 %v143
    %v293 = vunpack.c.l.b16 %v144
    %v294 = vunpack.c.l.b16 %v145
    %v295 = vunpack.c.l.b16 %v146
    %v296 = vunpack.c.l.b16 %v147
    %v297 = vunpack.c.l.b16 %v148
    %v298 = vunpack.c.l.b16 %v149
    %v299 = vunpack.c.l.b16 %v150
    %v300 = vunpack.c.l.b16 %v151
    %v301 = vunpack.c.l.b16 %v152
    %v302 = vunpack.c.l.b16 %v153
    %v303 = vunpack.c.l.b16 %v154
    %v304 = vunpack.c.l.b16 %v155
    %v305 = vunpack.c.l.b16 %v156
    %v306 = vunpack.c.l.b16 %v157
    %v307 = vunpack.c.l.b16 %v158
    %v308 = vunpack.c.l.b16 %v159
    %v309 = vunpack.c.l.b16 %v160
    %v310 = vunpack.c.l.b16 %v161
    %v311 = vunpack.c.l.b16 %v162
    %v312 = vunpack.c.l.b16 %v163
    %v313 = vunpack.c.l.b16 %v164
    %v314 = vunpack.c.l.b16 %v165
    %v315 = vunpack.c.l.b16 %v166
    %v316 = vunpack.c.l.b16 %v167
    %v317 = vunpack.c.l.b16 %v168
    %v318 = vunpack.c.l.b16 %v169
    %v319 = vunpack.c.l.b16 %v170
    %v320 = vunpack.c.l.b16 %v171
    %v321 = vunpack.c.l.b16 %v172
    %v322 = vunpack.c.l.b16 %v173
    %v323 = vunpack.c.l.b16 %v174
    %v324 = vunpack.c.l.b16 %v175
    %v325 = vunpack.c.l.b16 %v176
    %v326 = vunpack.c.l.b16 %v177
    %v327 = vpack.c.b16 %v264, %v263
    %v328 = vpack.c.b16 %v266, %v265
    %v329 = vpack.c.b16 %v268, %v267
    %v330 = vpack.c.b16 %v270, %v269
    %v331 = vpack.c.b16 %v272, %v271
    %v332 = vpack.c.b16 %v274, %v273
    %v333 = vpack.c.b16 %v276, %v275
    %v334 = vpack.c.b16 %v278, %v277
    %v335 = vpack.c.b16 %v280, %v279
    %v336 = vpack.c.b16 %v282, %v281
    %v337 = vpack.c.b16 %v284, %v283
    %v338 = vpack.c.b16 %v286, %v285
    %v339 = vpack.c.b16 %v288, %v287
    %v340 = vpack.c.b16 %v290, %v289
    %v341 = vpack.c.b16 %v292, %v291
    %v342 = vpack.c.b16 %v294, %v293
    %v343 = vpack.c.b16 %v296, %v295
    %v344 = vpack.c.b16 %v298, %v297
    %v345 = vpack.c.b16 %v300, %v299
    %v346 = vpack.c.b16 %v302, %v301
    %v347 = vpack.c.b16 %v304, %v303
    %v348 = vpack.c.b16 %v306, %v305
    %v349 = vpack.c.b16 %v308, %v307
    %v350 = vpack.c.b16 %v310, %v309
    %v351 = vpack.c.b16 %v312, %v311
    %v352 = vpack.c.b16 %v314, %v313
    %v353 = vpack.c.b16 %v316, %v315
    %v354 = vpack.c.b16 %v318, %v317
    %v355 = vpack.c.b16 %v320, %v319
    %v356 = vpack.c.b16 %v322, %v321
    %v357 = vpack.c.b16 %v324, %v323
    %v358 = vpack.c.b16 %v326, %v325
    %391 = vmatprep.subr.bf16.mxu0 0
    %392 = vmatpush1.bf16.msra.mxu0 %v327
    %393 = vmatprep.subr.bf16.mxu0 0
    %394 = vmatpush1.bf16.msra.mxu0 %v328
    %395 = vmatprep.subr.bf16.mxu0 0
    %396 = vmatpush1.bf16.msra.mxu0 %v329
    %397 = vmatprep.subr.bf16.mxu0 0
    %398 = vmatpush1.bf16.msra.mxu0 %v330
    %399 = vmatprep.subr.bf16.mxu0 0
    %400 = vmatpush1.bf16.msra.mxu0 %v331
    %401 = vmatprep.subr.bf16.mxu0 0
    %402 = vmatpush1.bf16.msra.mxu0 %v332
    %403 = vmatprep.subr.bf16.mxu0 0
    %404 = vmatpush1.bf16.msra.mxu0 %v333
    %405 = vmatprep.subr.bf16.mxu0 0
    %406 = vmatpush1.bf16.msra.mxu0 %v334
    %407 = vmatprep.subr.bf16.mxu0 0
    %408 = vmatpush1.bf16.msra.mxu0 %v335
    %409 = vmatprep.subr.bf16.mxu0 0
    %410 = vmatpush1.bf16.msra.mxu0 %v336
    %411 = vmatprep.subr.bf16.mxu0 0
    %412 = vmatpush1.bf16.msra.mxu0 %v337
    %413 = vmatprep.subr.bf16.mxu0 0
    %414 = vmatpush1.bf16.msra.mxu0 %v338
    %415 = vmatprep.subr.bf16.mxu0 0
    %416 = vmatpush1.bf16.msra.mxu0 %v339
    %417 = vmatprep.subr.bf16.mxu0 0
    %418 = vmatpush1.bf16.msra.mxu0 %v340
    %419 = vmatprep.subr.bf16.mxu0 0
    %420 = vmatpush1.bf16.msra.mxu0 %v341
    %421 = vmatprep.subr.bf16.mxu0 0
    %422 = vmatpush1.bf16.msra.mxu0 %v342
    %423 = vmatprep.mubr.bf16.mxu0 %v192
    %424 = vmatmul.mubr.bf16.gmra.mrb[0].mxu0 %v191
    %v425 = vpop.f32.mrb[0].mxu0
    %v426 = vadd.f32 %v183, %v425
    %v427 = vpop.f32.mrb[0].mxu0
    %v428 = vpop.f32.mrb[0].mxu0
    %v429 = vpop.f32.mrb[0].mxu0
    %430 = vdwg.mxu0
    %431 = vmatprep.subr.bf16.mxu0 0
    %432 = vmatpush1.bf16.msra.mxu0 %v343
    %433 = vmatprep.subr.bf16.mxu0 0
    %434 = vmatpush1.bf16.msra.mxu0 %v344
    %435 = vmatprep.subr.bf16.mxu0 0
    %436 = vmatpush1.bf16.msra.mxu0 %v345
    %437 = vmatprep.subr.bf16.mxu0 0
    %438 = vmatpush1.bf16.msra.mxu0 %v346
    %439 = vmatprep.subr.bf16.mxu0 0
    %440 = vmatpush1.bf16.msra.mxu0 %v347
    %441 = vmatprep.subr.bf16.mxu0 0
    %442 = vmatpush1.bf16.msra.mxu0 %v348
    %443 = vmatprep.subr.bf16.mxu0 0
    %444 = vmatpush1.bf16.msra.mxu0 %v349
    %445 = vmatprep.subr.bf16.mxu0 0
    %446 = vmatpush1.bf16.msra.mxu0 %v350
    %447 = vmatprep.subr.bf16.mxu0 0
    %448 = vmatpush1.bf16.msra.mxu0 %v351
    %449 = vmatprep.subr.bf16.mxu0 0
    %450 = vmatpush1.bf16.msra.mxu0 %v352
    %451 = vmatprep.subr.bf16.mxu0 0
    %452 = vmatpush1.bf16.msra.mxu0 %v353
    %453 = vmatprep.subr.bf16.mxu0 0
    %454 = vmatpush1.bf16.msra.mxu0 %v354
    %455 = vmatprep.subr.bf16.mxu0 0
    %456 = vmatpush1.bf16.msra.mxu0 %v355
    %457 = vmatprep.subr.bf16.mxu0 0
    %458 = vmatpush1.bf16.msra.mxu0 %v356
    %459 = vmatprep.subr.bf16.mxu0 0
    %460 = vmatpush1.bf16.msra.mxu0 %v357
    %461 = vmatprep.subr.bf16.mxu0 0
    %462 = vmatpush1.bf16.msra.mxu0 %v358
    %463 = vmatprep.mubr.bf16.mxu0 %v194
    %464 = vmatmul.mubr.bf16.gmra.mrb[0].mxu0 %v193
    %v465 = vpop.f32.mrb[0].mxu0
    %v466 = vadd.f32 %v426, %v465
    %v467 = vpop.f32.mrb[0].mxu0
    %v468 = vpop.f32.mrb[0].mxu0
    %v469 = vpop.f32.mrb[0].mxu0
    %470 = vdwg.mxu0
    %vm471 = vcmp.ge.f32.partialorder %v466, 0.0
    %v472 = vmul.f32 %v466, 0.2
    %v473 = vsel %vm471, %v466, %v472
    %v474 = vpack.c.bf16 %v473, %v473
    %v475 = vld [vmem:[#allocation8] sm:$0xf]
    %v476 = vld [vmem:[#allocation8 + $0x4] sm:$0xf]
    %v477 = vld [vmem:[#allocation8 + $0x8] sm:$0xf]
    %v478 = vld [vmem:[#allocation8 + $0xc] sm:$0xf]
    %v479 = vld [vmem:[#allocation8 + $0x10] sm:$0xf]
    %v480 = vld [vmem:[#allocation8 + $0x14] sm:$0xf]
    %v481 = vld [vmem:[#allocation8 + $0x18] sm:$0xf]
    %v482 = vld [vmem:[#allocation8 + $0x1c] sm:$0xf]
    %v483 = vld [vmem:[#allocation8 + $0x20] sm:$0xf]
    %v484 = vld [vmem:[#allocation8 + $0x24] sm:$0xf]
    %v485 = vld [vmem:[#allocation8 + $0x28] sm:$0xf]
    %v486 = vld [vmem:[#allocation8 + $0x2c] sm:$0xf]
    %v487 = vld [vmem:[#allocation8 + $0x30] sm:$0xf]
    %v488 = vld [vmem:[#allocation8 + $0x34] sm:$0xf]
    %v489 = vld [vmem:[#allocation8 + $0x38] sm:$0xf]
    %v490 = vld [vmem:[#allocation8 + $0x3c] sm:$0xf]
    %v491 = vld [vmem:[%s4] sm:$0x1]
    %v493 = vlaneseq
    %v494 = vshrl.u32 %v493, 7
    %v495 = vsub.s32 0, %v494
    %v496 = vrot.slane %v491, %v495
    %v514 = vunpack.c.l.b16 %v475
    %v515 = vunpack.c.l.b16 %v476
    %v516 = vunpack.c.l.b16 %v477
    %v517 = vunpack.c.l.b16 %v478
    %v518 = vunpack.c.l.b16 %v479
    %v519 = vunpack.c.l.b16 %v480
    %v520 = vunpack.c.l.b16 %v481
    %v521 = vunpack.c.l.b16 %v482
    %v522 = vunpack.c.l.b16 %v483
    %v523 = vunpack.c.l.b16 %v484
    %v524 = vunpack.c.l.b16 %v485
    %v525 = vunpack.c.l.b16 %v486
    %v526 = vunpack.c.l.b16 %v487
    %v527 = vunpack.c.l.b16 %v488
    %v528 = vunpack.c.l.b16 %v489
    %v529 = vunpack.c.l.b16 %v490
    %v530 = vpack.c.b16 %v515, %v514
    %v531 = vpack.c.b16 %v517, %v516
    %v532 = vpack.c.b16 %v519, %v518
    %v533 = vpack.c.b16 %v521, %v520
    %v534 = vpack.c.b16 %v523, %v522
    %v535 = vpack.c.b16 %v525, %v524
    %v536 = vpack.c.b16 %v527, %v526
    %v537 = vpack.c.b16 %v529, %v528
    %546 = vmatprep.subr.bf16.mxu0 0
    %547 = vmatpush1.bf16.msra.mxu0 %v530
    %548 = vmatprep.subr.bf16.mxu0 0
    %549 = vmatpush1.bf16.msra.mxu0 %v531
    %550 = vmatprep.subr.bf16.mxu0 0
    %551 = vmatpush1.bf16.msra.mxu0 %v532
    %552 = vmatprep.subr.bf16.mxu0 0
    %553 = vmatpush1.bf16.msra.mxu0 %v533
    %554 = vmatprep.subr.bf16.mxu0 0
    %555 = vmatpush1.bf16.msra.mxu0 %v534
    %556 = vmatprep.subr.bf16.mxu0 0
    %557 = vmatpush1.bf16.msra.mxu0 %v535
    %558 = vmatprep.subr.bf16.mxu0 0
    %559 = vmatpush1.bf16.msra.mxu0 %v536
    %560 = vmatprep.subr.bf16.mxu0 0
    %561 = vmatpush1.bf16.msra.mxu0 %v537
    %562 = vmatprep.subr.bf16.mxu0 0
    %563 = vmatpush1.bf16.msra.mxu0 0
    %564 = vmatprep.subr.bf16.mxu0 0
    %565 = vmatpush1.bf16.msra.mxu0 0
    %566 = vmatprep.subr.bf16.mxu0 0
    %567 = vmatpush1.bf16.msra.mxu0 0
    %568 = vmatprep.subr.bf16.mxu0 0
    %569 = vmatpush1.bf16.msra.mxu0 0
    %570 = vmatprep.subr.bf16.mxu0 0
    %571 = vmatpush1.bf16.msra.mxu0 0
    %572 = vmatprep.subr.bf16.mxu0 0
    %573 = vmatpush1.bf16.msra.mxu0 0
    %574 = vmatprep.subr.bf16.mxu0 0
    %575 = vmatpush1.bf16.msra.mxu0 0
    %576 = vmatprep.subr.bf16.mxu0 0
    %577 = vmatpush1.bf16.msra.mxu0 0
    %578 = vmatprep.mubr.bf16.mxu0 0
    %579 = vmatmul.mubr.bf16.gmra.mrb[0].mxu0 %v474
    %v580 = vpop.f32.mrb[0].mxu0
    %v581 = vadd.f32 %v496, %v580
    %v582 = vpop.f32.mrb[0].mxu0
    %v583 = vpop.f32.mrb[0].mxu0
    %v584 = vpop.f32.mrb[0].mxu0
    %585 = vdwg.mxu0
    %vm586 = vcmp.ge.f32.partialorder %v581, 0.0
    %v587 = vmul.f32 %v581, 0.2
    %v588 = vsel %vm586, %v581, %v587
    %v589 = vpack.c.bf16 %v588, %v588
    %v590 = vld [vmem:[#allocation9] sm:$0xf]
    %v591 = vld [vmem:[#allocation9 + $0x4] sm:$0xf]
    %v592 = vld [vmem:[#allocation9 + $0x8] sm:$0xf]
    %v593 = vld [vmem:[#allocation9 + $0xc] sm:$0xf]
    %v594 = vld [vmem:[#allocation9 + $0x10] sm:$0xf]
    %v595 = vld [vmem:[#allocation9 + $0x14] sm:$0xf]
    %v596 = vld [vmem:[#allocation9 + $0x18] sm:$0xf]
    %v597 = vld [vmem:[#allocation9 + $0x1c] sm:$0xf]
    %v598 = vld [vmem:[#allocation9 + $0x20] sm:$0xf]
    %v599 = vld [vmem:[#allocation9 + $0x24] sm:$0xf]
    %v600 = vld [vmem:[#allocation9 + $0x28] sm:$0xf]
    %v601 = vld [vmem:[#allocation9 + $0x2c] sm:$0xf]
    %v602 = vld [vmem:[#allocation9 + $0x30] sm:$0xf]
    %v603 = vld [vmem:[#allocation9 + $0x34] sm:$0xf]
    %v604 = vld [vmem:[#allocation9 + $0x38] sm:$0xf]
    %v605 = vld [vmem:[#allocation9 + $0x3c] sm:$0xf]
    %v606 = vld [vmem:[%s6] sm:$0x1]
    %v608 = vlaneseq
    %v609 = vshrl.u32 %v608, 7
    %v610 = vsub.s32 0, %v609
    %v611 = vrot.slane %v606, %v610
    %v629 = vunpack.c.l.b16 %v590
    %v630 = vunpack.c.l.b16 %v591
    %v631 = vunpack.c.l.b16 %v592
    %v632 = vunpack.c.l.b16 %v593
    %v633 = vunpack.c.l.b16 %v594
    %v634 = vunpack.c.l.b16 %v595
    %v635 = vunpack.c.l.b16 %v596
    %v636 = vunpack.c.l.b16 %v597
    %v637 = vunpack.c.l.b16 %v598
    %v638 = vunpack.c.l.b16 %v599
    %v639 = vunpack.c.l.b16 %v600
    %v640 = vunpack.c.l.b16 %v601
    %v641 = vunpack.c.l.b16 %v602
    %v642 = vunpack.c.l.b16 %v603
    %v643 = vunpack.c.l.b16 %v604
    %v644 = vunpack.c.l.b16 %v605
    %v645 = vpack.c.b16 %v630, %v629
    %v646 = vpack.c.b16 %v632, %v631
    %v647 = vpack.c.b16 %v634, %v633
    %v648 = vpack.c.b16 %v636, %v635
    %v649 = vpack.c.b16 %v638, %v637
    %v650 = vpack.c.b16 %v640, %v639
    %v651 = vpack.c.b16 %v642, %v641
    %v652 = vpack.c.b16 %v644, %v643
    %661 = vmatprep.subr.bf16.mxu0 0
    %662 = vmatpush1.bf16.msra.mxu0 %v645
    %663 = vmatprep.subr.bf16.mxu0 0
    %664 = vmatpush1.bf16.msra.mxu0 %v646
    %665 = vmatprep.subr.bf16.mxu0 0
    %666 = vmatpush1.bf16.msra.mxu0 %v647
    %667 = vmatprep.subr.bf16.mxu0 0
    %668 = vmatpush1.bf16.msra.mxu0 %v648
    %669 = vmatprep.subr.bf16.mxu0 0
    %670 = vmatpush1.bf16.msra.mxu0 %v649
    %671 = vmatprep.subr.bf16.mxu0 0
    %672 = vmatpush1.bf16.msra.mxu0 %v650
    %673 = vmatprep.subr.bf16.mxu0 0
    %674 = vmatpush1.bf16.msra.mxu0 %v651
    %675 = vmatprep.subr.bf16.mxu0 0
    %676 = vmatpush1.bf16.msra.mxu0 %v652
    %677 = vmatprep.subr.bf16.mxu0 0
    %678 = vmatpush1.bf16.msra.mxu0 0
    %679 = vmatprep.subr.bf16.mxu0 0
    %680 = vmatpush1.bf16.msra.mxu0 0
    %681 = vmatprep.subr.bf16.mxu0 0
    %682 = vmatpush1.bf16.msra.mxu0 0
    %683 = vmatprep.subr.bf16.mxu0 0
    %684 = vmatpush1.bf16.msra.mxu0 0
    %685 = vmatprep.subr.bf16.mxu0 0
    %686 = vmatpush1.bf16.msra.mxu0 0
    %687 = vmatprep.subr.bf16.mxu0 0
    %688 = vmatpush1.bf16.msra.mxu0 0
    %689 = vmatprep.subr.bf16.mxu0 0
    %690 = vmatpush1.bf16.msra.mxu0 0
    %691 = vmatprep.subr.bf16.mxu0 0
    %692 = vmatpush1.bf16.msra.mxu0 0
    %693 = vmatprep.mubr.bf16.mxu0 0
    %694 = vmatmul.mubr.bf16.gmra.mrb[0].mxu0 %v589
    %v695 = vpop.f32.mrb[0].mxu0
    %v696 = vadd.f32 %v611, %v695
    %v697 = vpop.f32.mrb[0].mxu0
    %v698 = vpop.f32.mrb[0].mxu0
    %v699 = vpop.f32.mrb[0].mxu0
    %700 = vdwg.mxu0
    %vm701 = vcmp.ge.f32.partialorder %v696, 0.0
    %v702 = vmul.f32 %v696, 0.2
    %v703 = vsel %vm701, %v696, %v702
    %705 = vrot.lane.b32.xlu0 %v703, 1
    %v706 = vpop.permute.xlu0 %705
    %vm708 = vcmask 7168
    %v709 = vsel %vm708, 0.0, %v706
    %vm710 = vcmask 826368
    %v711 = vsel %vm710, %v709, 0.0
    %s712 = sld [smem:[#allocation11]]
    %s713 = sld [smem:[#allocation12]]
    %v714 = vstv %s712
    %v715 = vmul.f32 %v711, %v714
    %v716 = vstv %s713
    %v717 = vadd.f32 %v715, %v716
    %vm718 = vcmp.ge.f32.partialorder %v717, 0.0
    %v719 = vmul.f32 %v717, 0.2
    %v720 = vsel %vm718, %v717, %v719
    %s721 = sld [smem:[#allocation11 + $0x1]]
    %s722 = sld [smem:[#allocation12 + $0x1]]
    %v723 = vstv %s721
    %v724 = vmul.f32 %v711, %v723
    %v725 = vstv %s722
    %v726 = vadd.f32 %v724, %v725
    %vm727 = vcmp.ge.f32.partialorder %v726, 0.0
    %v728 = vmul.f32 %v726, 0.2
    %v729 = vsel %vm727, %v726, %v728
    %s730 = sld [smem:[#allocation11 + $0x2]]
    %s731 = sld [smem:[#allocation12 + $0x2]]
    %v732 = vstv %s730
    %v733 = vmul.f32 %v711, %v732
    %v734 = vstv %s731
    %v735 = vadd.f32 %v733, %v734
    %vm736 = vcmp.ge.f32.partialorder %v735, 0.0
    %v737 = vmul.f32 %v735, 0.2
    %v738 = vsel %vm736, %v735, %v737
    %740 = vrot.lane.b32.xlu0 %v729, 102
    %v741 = vpop.permute.xlu0 %740
    %744 = vrot.lane.b32.xlu0 %v738, 76
    %v745 = vpop.permute.xlu0 %744
    %vm747 = vcmask 834560
    %v748 = vsel %vm747, %v720, %v741
    %vm749 = vcmask 621568
    %v750 = vsel %vm749, %v741, %v745
    %751 = vst [vmem:[#allocation14] sm:$0xff] %v748
    %752 = vst [vmem:[#allocation14 + $0x8] sm:$0xff] %v750
    %vm753 = vcmask 408576
    %754 = vst.msk [vmem:[#allocation14 + $0x10] sm:$0xff] %vm753, %v745
    // Predicated region
    $region62: #{tpu_custom_call.1} parent=1 // pred_check
      _
    $region63: #{tpu_custom_call.1} parent=1 // pred_check_branch
      %756 = sbr.rel (0) target = $region65
    $region64: #{tpu_custom_call.1} parent=1 // pred_region
      %s758 = ssub.s32 384, 384
      %759 = vsyncadd [#allocation4], %s758
      %s761 = sshll.u32 [#allocation14], 4
      %s762 = int_to_ptr.vmem [resolvable:$true] %s761
      %764 = dma.vmem_to_hbm [thread:$0]  %s762, 384, %s9, [#allocation4]
    $region65: #{tpu_custom_call.1} parent=1 // pred_fallthru
      _
    // Predicated region
    $region66: #{tpu_custom_call.1} parent=1 // pred_check
      _
    $region67: #{tpu_custom_call.1} parent=1 // pred_check_branch
      %766 = sbr.rel (0) target = $region69
    $region68: #{tpu_custom_call.1} parent=1 // pred_region
      %767 = dma.done [#allocation4], 384
    $region69: #{tpu_custom_call.1} parent=1 // pred_fallthru
      _
    %768 = vsyncpa [#allocation3], 1
    %769 = vsyncpa [#allocation7], 1
    %770 = vsyncpa [#allocation10], 1
    %771 = vsyncpa [#allocation4], 1
    %772 = vsyncpa [#allocation5], 1
    %773 = vsyncpa [#allocation13], 1

</llo_original>
